<compile_context>
chip_gen: v5e
topology: v5e:2x2
jax: 0.10.0
libtpu: 0.0.40
codegen_flags: <defaults>
</compile_context>

<pallas_src>
import collections

import numpy as np
import jax
import jax.numpy as jnp
from jax.experimental import pallas as pl
from jax.experimental.pallas import tpu as pltpu


_HIGHEST = jax.lax.Precision.HIGHEST
_SMALL_BATCH_MAX = 128   # <= this: single full-array block, row-major layout
_TARGET_TILE_B = 1024    # lanes per grid step for the lane-dense large-batch path

LowModelParams = collections.namedtuple("LowModelParams", ("rm", "ld"))


def _dot(a, b):
    # Pinned precision: exact-ish f32 on the MXU (multi-pass), per perf review.
    return jnp.dot(a, b, preferred_element_type=jnp.float32, precision=_HIGHEST)


# --------------------------------------------------------------------------
# Kernels
# --------------------------------------------------------------------------
def _mlp_rowmajor_kernel(x_ref, wf_ref, bf_ref, wm_ref, bm_ref, wl_ref, bl_ref,
                         o_ref):
    """Small-batch path: activations (B, F); weights pre-transposed (in, out)."""
    h = jnp.tanh(_dot(x_ref[...], wf_ref[...]) + bf_ref[...])
    for l in range(wm_ref.shape[0]):
        h = jnp.tanh(_dot(h, wm_ref[l]) + bm_ref[l])
    o_ref[...] = _dot(h, wl_ref[...]) + bl_ref[...]


def _mlp_lanedense_kernel(x_ref, wf_ref, bf_ref, wm_ref, bm_ref, wl_ref, bl_ref,
                          o_ref):
    """Large-batch path: activations (F, tile_b); weights in (out, in) layout."""
    h = jnp.tanh(_dot(wf_ref[...], x_ref[...]) + bf_ref[...])
    for l in range(wm_ref.shape[0]):
        h = jnp.tanh(_dot(wm_ref[l], h) + bm_ref[l])
    o_ref[...] = _dot(wl_ref[...], h) + bl_ref[...]


# --------------------------------------------------------------------------
# One-time host-side parameter packing
# --------------------------------------------------------------------------
def pack_low_model_params(weights, biases):
    """Pack LowModel parameters once (host-side numpy), in both layouts.

    weights: list of (out_f, in_f) arrays (PyTorch nn.Linear convention)
    biases:  list of (out_f,) arrays
    Returns LowModelParams(rm=..., ld=...) with:
      rm: row-major layout (weights transposed to (in, out)) for small batches
      ld: lane-dense layout (weights kept (out, in)) for large batches
    Hidden widths are zero-padded to a common sublane-multiple F; the first
    layer keeps its exact input width and the last its exact output width,
    so activations never need wrapper-side padding.
    """
    weights = [np.asarray(w, np.float32) for w in weights]
    biases = [np.asarray(b, np.float32) for b in biases]
    n_layers = len(weights)
    if n_layers < 3:
        raise ValueError("LowModel always has at least 4 linear layers")

    in_n = weights[0].shape[1]
    out_n = weights[-1].shape[0]
    hidden = [w.shape[0] for w in weights[:-1]]          # in_W, width..., out_W
    feat = max(8, -(-max(hidden) // 8) * 8)              # sublane multiple
    n_mid = n_layers - 2

    wf = np.zeros((feat, in_n), np.float32)
    wf[: weights[0].shape[0], :] = weights[0]
    bf = np.zeros((feat,), np.float32)
    bf[: biases[0].shape[0]] = biases[0]

    wm = np.zeros((n_mid, feat, feat), np.float32)
    bm = np.zeros((n_mid, feat), np.float32)
    for idx in range(n_mid):
        w, b = weights[idx + 1], biases[idx + 1]
        of, inf = w.shape
        wm[idx, :of, :inf] = w
        bm[idx, :of] = b

    wl = np.zeros((out_n, feat), np.float32)
    wl[:, : weights[-1].shape[1]] = weights[-1]
    bl = biases[-1]

    rm = tuple(jnp.asarray(a) for a in (
        np.ascontiguousarray(wf.T), bf.reshape(1, feat),
        np.ascontiguousarray(wm.transpose(0, 2, 1)), bm.reshape(n_mid, 1, feat),
        np.ascontiguousarray(wl.T), bl.reshape(1, out_n)))
    ld = tuple(jnp.asarray(a) for a in (
        wf, bf.reshape(feat, 1), wm, bm.reshape(n_mid, feat, 1),
        wl, bl.reshape(out_n, 1)))
    return LowModelParams(rm=rm, ld=ld)


# --------------------------------------------------------------------------
# Forward passes
# --------------------------------------------------------------------------
@jax.jit
def _forward_small(x, wf, bf, wm, bm, wl, bl):
    """B <= _SMALL_BATCH_MAX: one fused kernel, no grid, no padding, no slicing."""
    B, in_n = x.shape
    feat = wf.shape[1]
    out_n = wl.shape[1]
    n_mid = wm.shape[0]

    flops = 2 * B * (in_n * feat + n_mid * feat * feat + feat * out_n)
    transcendentals = B * feat * (n_mid + 1)
    bytes_accessed = 4 * (x.size + wf.size + bf.size + wm.size + bm.size
                          + wl.size + bl.size + B * out_n)

    return pl.pallas_call(
        _mlp_rowmajor_kernel,
        out_shape=jax.ShapeDtypeStruct((B, out_n), jnp.float32),
        cost_estimate=pl.CostEstimate(
            flops=flops, transcendentals=transcendentals,
            bytes_accessed=bytes_accessed),
    )(x, wf, bf, wm, bm, wl, bl)


def _round_up(x, m):
    return -(-x // m) * m


def _large_batch_tiling(B):
    # Big tiles amortize the ~0.35us per-grid-step overhead; an *even* number
    # of 'parallel' steps lets v7x's two TensorCores split the batch evenly.
    pairs = max(1, int(round(B / (2 * _TARGET_TILE_B))))
    n_steps = 2 * pairs
    tile_b = _round_up(_round_up(B, n_steps) // n_steps, 128)   # lane multiple
    b_pad = tile_b * n_steps
    return tile_b, n_steps, b_pad


@jax.jit
def _forward_large(x, wf, bf, wm, bm, wl, bl):
    """B > _SMALL_BATCH_MAX: lane-dense (F, batch) activations, batch-tiled grid."""
    B, in_n = x.shape
    feat = wf.shape[0]
    out_n = wl.shape[0]
    n_mid = wm.shape[0]
    tile_b, n_steps, b_pad = _large_batch_tiling(B)

    x_t = x.T                                   # (in_n, B): batch in lanes
    if b_pad != B:
        x_t = jnp.pad(x_t, ((0, 0), (0, b_pad - B)))

    flops = 2 * b_pad * (in_n * feat + n_mid * feat * feat + feat * out_n)
    transcendentals = b_pad * feat * (n_mid + 1)
    bytes_accessed = 4 * (x_t.size + wf.size + bf.size + wm.size + bm.size
                          + wl.size + bl.size + out_n * b_pad)

    # Weights/biases use constant index_maps so Pallas never re-DMAs them
    # across batch tiles; their redundant second pipeline buffer is only ~24
    # KiB, so pipeline_mode=pl.Buffered(1) is intentionally not forced (keeps
    # compatibility across JAX versions at negligible VMEM cost).
    out_t = pl.pallas_call(
        _mlp_lanedense_kernel,
        out_shape=jax.ShapeDtypeStruct((out_n, b_pad), jnp.float32),
        grid=(n_steps,),
        in_specs=[
            pl.BlockSpec((in_n, tile_b), lambda i: (0, i)),
            pl.BlockSpec((feat, in_n), lambda i: (0, 0)),
            pl.BlockSpec((feat, 1), lambda i: (0, 0)),
            pl.BlockSpec((n_mid, feat, feat), lambda i: (0, 0, 0)),
            pl.BlockSpec((n_mid, feat, 1), lambda i: (0, 0, 0)),
            pl.BlockSpec((out_n, feat), lambda i: (0, 0)),
            pl.BlockSpec((out_n, 1), lambda i: (0, 0)),
        ],
        out_specs=pl.BlockSpec((out_n, tile_b), lambda i: (0, i)),
        compiler_params=pltpu.CompilerParams(
            dimension_semantics=("parallel",)),
        cost_estimate=pl.CostEstimate(
            flops=flops, transcendentals=transcendentals,
            bytes_accessed=bytes_accessed),
    )(x_t, wf, bf, wm, bm, wl, bl)

    return out_t[:, :B].T


def low_model_forward(x, params):
    """LowModel forward: x (B, in_N) float32 -> (B, out_N) float32."""
    if x.shape[0] <= _SMALL_BATCH_MAX:
        return _forward_small(x, *params.rm)
    return _forward_large(x, *params.ld)


# --------------------------------------------------------------------------
# Reference / test harness
# --------------------------------------------------------------------------
def _init_linear(key, out_f, in_f):
    """Deterministic init mimicking nn.Linear's U(-1/sqrt(in), 1/sqrt(in))."""
    kw, kb = jax.random.split(key)
    bound = 1.0 / jnp.sqrt(jnp.float32(in_f))
    w = jax.random.uniform(kw, (out_f, in_f), jnp.float32, -bound, bound)
    b = jax.random.uniform(kb, (out_f,), jnp.float32, -bound, bound)
    return w, b


def _reference_forward(x, weights, biases):
    h = x
    n = len(weights)
    for i, (w, b) in enumerate(zip(weights, biases)):
        h = jnp.dot(h, w.T, precision=_HIGHEST) + b
        if i < n - 1:
            h = jnp.tanh(h)
    return h


if __name__ == "__main__":
    # LowModel(in_N, in_W, width, depth, out_W, out_N)
    in_N, in_W, width, depth, out_W, out_N = 4, 32, 32, 2, 16, 2

    # Layer sizes in order: in->in_W, in_W->width, depth x width->width,
    # width->out_W, out_W->out_N (tanh after every layer except the last).
    dims = [(in_W, in_N), (width, in_W)]
    dims += [(width, width)] * depth
    dims += [(out_W, width), (out_N, out_W)]

    key = jax.random.PRNGKey(0)
    keys = jax.random.split(key, len(dims) + 2)
    weights, biases = [], []
    for k, (of, inf) in zip(keys[: len(dims)], dims):
        w, b = _init_linear(k, of, inf)
        weights.append(w)
        biases.append(b)

    # One-time packing (hoisted out of the per-call path).
    params = pack_low_model_params(weights, biases)

    # Small-batch path (the shape this model is typically evaluated at).
    x_small = jax.random.normal(keys[-2], (8, in_N), jnp.float32)
    out_small = jax.block_until_ready(low_model_forward(x_small, params))
    ref_small = _reference_forward(x_small, weights, biases)
    assert out_small.shape == (8, out_N)
    assert jnp.allclose(out_small, ref_small, atol=1e-5, rtol=1e-5), \
        "small-batch mismatch vs reference"

    # Large-batch lane-dense path (exercises grid tiling + batch padding).
    x_large = jax.random.normal(keys[-1], (640, in_N), jnp.float32)
    out_large = jax.block_until_ready(low_model_forward(x_large, params))
    ref_large = _reference_forward(x_large, weights, biases)
    assert out_large.shape == (640, out_N)
    assert jnp.allclose(out_large, ref_large, atol=1e-5, rtol=1e-5), \
        "large-batch mismatch vs reference"

    print("KERNEL_OK")
</pallas_src>

<mosaic_0001>
module attributes {stable_mosaic.version = 11 : i64} {
  func.func @_mlp_rowmajor_kernel(%arg0: memref<8x4xf32, #tpu.memory_space<vmem>>, %arg1: memref<4x32xf32, #tpu.memory_space<vmem>>, %arg2: memref<1x32xf32, #tpu.memory_space<vmem>>, %arg3: memref<4x32x32xf32, #tpu.memory_space<vmem>>, %arg4: memref<4x1x32xf32, #tpu.memory_space<vmem>>, %arg5: memref<32x2xf32, #tpu.memory_space<vmem>>, %arg6: memref<1x2xf32, #tpu.memory_space<vmem>>, %arg7: memref<8x2xf32, #tpu.memory_space<vmem>>) attributes {dimension_semantics = [], scalar_prefetch = 0 : i64, scratch_operands = 0 : i64, tpu.core_type = #tpu.core_type<tc>} {
    %c0 = arith.constant 0 : index
    %c0_0 = arith.constant 0 : index
    %0 = vector.load %arg0[%c0, %c0_0] : memref<8x4xf32, #tpu.memory_space<vmem>>, vector<8x4xf32>
    %c0_1 = arith.constant 0 : index
    %c0_2 = arith.constant 0 : index
    %1 = vector.load %arg1[%c0_1, %c0_2] : memref<4x32xf32, #tpu.memory_space<vmem>>, vector<4x32xf32>
    %cst = arith.constant dense<0.000000e+00> : vector<8x32xf32>
    %2 = tpu.matmul %0, %1, %cst {dimension_numbers = #tpu.dot_dimension_numbers<[1], [0], [0], [1], [0, 0, 1, 1], [], []>, precision = #tpu.contract_precision<fp32>} : vector<8x4xf32>, vector<4x32xf32>, vector<8x32xf32> -> vector<8x32xf32>
    %c0_3 = arith.constant 0 : index
    %c0_4 = arith.constant 0 : index
    %3 = vector.load %arg2[%c0_3, %c0_4] : memref<1x32xf32, #tpu.memory_space<vmem>>, vector<1x32xf32>
    %4 = vector.broadcast %3 : vector<1x32xf32> to vector<8x32xf32>
    %5 = arith.addf %2, %4 : vector<8x32xf32>
    %6 = math.tanh %5 : vector<8x32xf32>
    %c0_5 = arith.constant 0 : index
    %c0_6 = arith.constant 0 : index
    %c0_7 = arith.constant 0 : index
    %7 = vector.load %arg3[%c0_5, %c0_6, %c0_7] : memref<4x32x32xf32, #tpu.memory_space<vmem>>, vector<1x32x32xf32>
    %8 = vector.shape_cast %7 : vector<1x32x32xf32> to vector<32x32xf32>
    %cst_8 = arith.constant dense<0.000000e+00> : vector<8x32xf32>
    %9 = tpu.matmul %6, %8, %cst_8 {dimension_numbers = #tpu.dot_dimension_numbers<[1], [0], [0], [1], [0, 0, 1, 1], [], []>, precision = #tpu.contract_precision<fp32>} : vector<8x32xf32>, vector<32x32xf32>, vector<8x32xf32> -> vector<8x32xf32>
    %c0_9 = arith.constant 0 : index
    %c0_10 = arith.constant 0 : index
    %c0_11 = arith.constant 0 : index
    %10 = vector.load %arg4[%c0_9, %c0_10, %c0_11] : memref<4x1x32xf32, #tpu.memory_space<vmem>>, vector<1x1x32xf32>
    %11 = vector.shape_cast %10 : vector<1x1x32xf32> to vector<1x32xf32>
    %12 = vector.broadcast %11 : vector<1x32xf32> to vector<8x32xf32>
    %13 = arith.addf %9, %12 : vector<8x32xf32>
    %14 = math.tanh %13 : vector<8x32xf32>
    %c1 = arith.constant 1 : index
    %c0_12 = arith.constant 0 : index
    %c0_13 = arith.constant 0 : index
    %15 = vector.load %arg3[%c1, %c0_12, %c0_13] : memref<4x32x32xf32, #tpu.memory_space<vmem>>, vector<1x32x32xf32>
    %16 = vector.shape_cast %15 : vector<1x32x32xf32> to vector<32x32xf32>
    %cst_14 = arith.constant dense<0.000000e+00> : vector<8x32xf32>
    %17 = tpu.matmul %14, %16, %cst_14 {dimension_numbers = #tpu.dot_dimension_numbers<[1], [0], [0], [1], [0, 0, 1, 1], [], []>, precision = #tpu.contract_precision<fp32>} : vector<8x32xf32>, vector<32x32xf32>, vector<8x32xf32> -> vector<8x32xf32>
    %c1_15 = arith.constant 1 : index
    %c0_16 = arith.constant 0 : index
    %c0_17 = arith.constant 0 : index
    %18 = vector.load %arg4[%c1_15, %c0_16, %c0_17] : memref<4x1x32xf32, #tpu.memory_space<vmem>>, vector<1x1x32xf32>
    %19 = vector.shape_cast %18 : vector<1x1x32xf32> to vector<1x32xf32>
    %20 = vector.broadcast %19 : vector<1x32xf32> to vector<8x32xf32>
    %21 = arith.addf %17, %20 : vector<8x32xf32>
    %22 = math.tanh %21 : vector<8x32xf32>
    %c2 = arith.constant 2 : index
    %c0_18 = arith.constant 0 : index
    %c0_19 = arith.constant 0 : index
    %23 = vector.load %arg3[%c2, %c0_18, %c0_19] : memref<4x32x32xf32, #tpu.memory_space<vmem>>, vector<1x32x32xf32>
    %24 = vector.shape_cast %23 : vector<1x32x32xf32> to vector<32x32xf32>
    %cst_20 = arith.constant dense<0.000000e+00> : vector<8x32xf32>
    %25 = tpu.matmul %22, %24, %cst_20 {dimension_numbers = #tpu.dot_dimension_numbers<[1], [0], [0], [1], [0, 0, 1, 1], [], []>, precision = #tpu.contract_precision<fp32>} : vector<8x32xf32>, vector<32x32xf32>, vector<8x32xf32> -> vector<8x32xf32>
    %c2_21 = arith.constant 2 : index
    %c0_22 = arith.constant 0 : index
    %c0_23 = arith.constant 0 : index
    %26 = vector.load %arg4[%c2_21, %c0_22, %c0_23] : memref<4x1x32xf32, #tpu.memory_space<vmem>>, vector<1x1x32xf32>
    %27 = vector.shape_cast %26 : vector<1x1x32xf32> to vector<1x32xf32>
    %28 = vector.broadcast %27 : vector<1x32xf32> to vector<8x32xf32>
    %29 = arith.addf %25, %28 : vector<8x32xf32>
    %30 = math.tanh %29 : vector<8x32xf32>
    %c3 = arith.constant 3 : index
    %c0_24 = arith.constant 0 : index
    %c0_25 = arith.constant 0 : index
    %31 = vector.load %arg3[%c3, %c0_24, %c0_25] : memref<4x32x32xf32, #tpu.memory_space<vmem>>, vector<1x32x32xf32>
    %32 = vector.shape_cast %31 : vector<1x32x32xf32> to vector<32x32xf32>
    %cst_26 = arith.constant dense<0.000000e+00> : vector<8x32xf32>
    %33 = tpu.matmul %30, %32, %cst_26 {dimension_numbers = #tpu.dot_dimension_numbers<[1], [0], [0], [1], [0, 0, 1, 1], [], []>, precision = #tpu.contract_precision<fp32>} : vector<8x32xf32>, vector<32x32xf32>, vector<8x32xf32> -> vector<8x32xf32>
    %c3_27 = arith.constant 3 : index
    %c0_28 = arith.constant 0 : index
    %c0_29 = arith.constant 0 : index
    %34 = vector.load %arg4[%c3_27, %c0_28, %c0_29] : memref<4x1x32xf32, #tpu.memory_space<vmem>>, vector<1x1x32xf32>
    %35 = vector.shape_cast %34 : vector<1x1x32xf32> to vector<1x32xf32>
    %36 = vector.broadcast %35 : vector<1x32xf32> to vector<8x32xf32>
    %37 = arith.addf %33, %36 : vector<8x32xf32>
    %38 = math.tanh %37 : vector<8x32xf32>
    %c0_30 = arith.constant 0 : index
    %c0_31 = arith.constant 0 : index
    %39 = vector.load %arg5[%c0_30, %c0_31] : memref<32x2xf32, #tpu.memory_space<vmem>>, vector<32x2xf32>
    %cst_32 = arith.constant dense<0.000000e+00> : vector<8x2xf32>
    %40 = tpu.matmul %38, %39, %cst_32 {dimension_numbers = #tpu.dot_dimension_numbers<[1], [0], [0], [1], [0, 0, 1, 1], [], []>, precision = #tpu.contract_precision<fp32>} : vector<8x32xf32>, vector<32x2xf32>, vector<8x2xf32> -> vector<8x2xf32>
    %c0_33 = arith.constant 0 : index
    %c0_34 = arith.constant 0 : index
    %41 = vector.load %arg6[%c0_33, %c0_34] : memref<1x2xf32, #tpu.memory_space<vmem>>, vector<1x2xf32>
    %42 = vector.broadcast %41 : vector<1x2xf32> to vector<8x2xf32>
    %43 = arith.addf %40, %42 : vector<8x2xf32>
    %c0_35 = arith.constant 0 : index
    %c0_36 = arith.constant 0 : index
    %44 = vector.load %arg7[%c0_35, %c0_36] : memref<8x2xf32, #tpu.memory_space<vmem>>, vector<8x2xf32>
    tpu.vector_store %arg7[%c0_35, %c0_36], %43 {strides = array<i32>} : memref<8x2xf32, #tpu.memory_space<vmem>>, vector<8x2xf32>,
    return
  }
}

</mosaic_0001>

<llo_original>
// kernel: _forward_small.1
$region0: #{_forward_small.1}
  #allocation0 [shape = 'u32[]', space=smem, size = 0x4, offset = 0x4, fixed_abs, tag = 'smem constant byte address 0x4 - core index']
  #allocation1 [shape = 'u32[72,128]{1,0:T(1,128)}', space=vmem, size = 0x9000, scoped, tag = 'internal scratch']
  %s0 = inlined_call_operand.vmem [shape: f32[8,4], index: 0, kind: input, shape index: {}]
  %s1 = inlined_call_operand.vmem [shape: f32[4,32], index: 1, kind: input, shape index: {}]
  %s2 = inlined_call_operand.vmem [shape: f32[1,32], index: 2, kind: input, shape index: {}]
  %s3 = inlined_call_operand.hbm [shape: f32[4,32,32], index: 3, kind: input, shape index: {}]
  %s4 = inlined_call_operand.vmem [shape: f32[4,1,32], index: 4, kind: input, shape index: {}]
  %s5 = inlined_call_operand.vmem [shape: f32[32,2], index: 5, kind: input, shape index: {}]
  %s6 = inlined_call_operand.vmem [shape: f32[1,2], index: 6, kind: input, shape index: {}]
  %s7 = inlined_call_operand.vmem [shape: f32[8,2], index: 7, kind: output, shape index: {}]
  %s8 = sld [smem:[#allocation0]]
  $region42: #{_forward_small.1} parent=0
    _
  %s10 = ssub.s32 1, %s8
  %s11 = scalar_select 0, %s10, %s8
  $region1: #{_forward_small.1} parent=0
    #allocation2 [shape = 'u8[65536]{0}', space=vmem, size = 0x10000, scoped, tag = 'input window, operand 3, single buffered']
    #allocation3 [shape = 's32[1]{0}', space=sflag, size = 0x4, scoped, tag = 'scoped memory for _forward_small.1']
    %12 = vsyncpa [#allocation3], 0
    // Predicated region
    $region2: #{_forward_small.1} parent=1 // pred_check
      _
    $region3: #{_forward_small.1} parent=1 // pred_check_branch
      %14 = sbr.rel (0) target = $region5
    $region4: #{_forward_small.1} parent=1 // pred_region
      _
    $region5: #{_forward_small.1} parent=1 // pred_fallthru
      _
    // Predicated region
    $region6: #{_forward_small.1} parent=1 // pred_check
      _
    $region7: #{_forward_small.1} parent=1 // pred_check_branch
      %16 = sbr.rel (0) target = $region9
    $region8: #{_forward_small.1} parent=1 // pred_region
      _
    $region9: #{_forward_small.1} parent=1 // pred_fallthru
      _
    // Predicated region
    $region10: #{_forward_small.1} parent=1 // pred_check
      _
    $region11: #{_forward_small.1} parent=1 // pred_check_branch
      %18 = sbr.rel (0) target = $region13
    $region12: #{_forward_small.1} parent=1 // pred_region
      _
    $region13: #{_forward_small.1} parent=1 // pred_fallthru
      _
    // Predicated region
    $region14: #{_forward_small.1} parent=1 // pred_check
      _
    $region15: #{_forward_small.1} parent=1 // pred_check_branch
      %20 = sbr.rel (0) target = $region17
    $region16: #{_forward_small.1} parent=1 // pred_region
      %22 = vsyncadd [#allocation3], 0
      %s23 = sshll.u32 %s3, 4
      %s24 = int_to_ptr.hbm [resolvable:$true] %s23
      %s25 = sshll.u32 [#allocation2], 4
      %s26 = int_to_ptr.vmem [resolvable:$true] %s25
      %31 = dma.hbm_to_vmem [thread:$0]  %s24, 2048, %s26, [#allocation3], 128, 128, 8
    $region17: #{_forward_small.1} parent=1 // pred_fallthru
      _
    // Predicated region
    $region18: #{_forward_small.1} parent=1 // pred_check
      _
    $region19: #{_forward_small.1} parent=1 // pred_check_branch
      %33 = sbr.rel (0) target = $region21
    $region20: #{_forward_small.1} parent=1 // pred_region
      _
    $region21: #{_forward_small.1} parent=1 // pred_fallthru
      _
    // Predicated region
    $region22: #{_forward_small.1} parent=1 // pred_check
      _
    $region23: #{_forward_small.1} parent=1 // pred_check_branch
      %35 = sbr.rel (0) target = $region25
    $region24: #{_forward_small.1} parent=1 // pred_region
      _
    $region25: #{_forward_small.1} parent=1 // pred_fallthru
      _
    // Predicated region
    $region26: #{_forward_small.1} parent=1 // pred_check
      _
    $region27: #{_forward_small.1} parent=1 // pred_check_branch
      %37 = sbr.rel (0) target = $region29
    $region28: #{_forward_small.1} parent=1 // pred_region
      _
    $region29: #{_forward_small.1} parent=1 // pred_fallthru
      _
    // Predicated region
    $region30: #{_forward_small.1} parent=1 // pred_check
      _
    $region31: #{_forward_small.1} parent=1 // pred_check_branch
      %39 = sbr.rel (0) target = $region33
    $region32: #{_forward_small.1} parent=1 // pred_region
      %41 = dma.done [#allocation3], 2048
    $region33: #{_forward_small.1} parent=1 // pred_fallthru
      _
    %v42 = vld [vmem:[%s0] sm:$0xff]
    %v43 = vld [vmem:[%s1] sm:$0xf]
    %v44 = vld [vmem:[%s2] sm:$0x1]
    %v46 = vperm.slane %v44, 0
    %vm48 = vcmask 31744
    %v50 = vsel %vm48, %v42, 0
    %vm52 = vcmask 1043456
    %v54 = vsel %vm52, %v43, 0
    %56 = vmatpush.msra.mxu0 0.0
    %57 = vmatpush.msra.mxu0 0.0
    %58 = vmatpush.msra.mxu0 0.0
    %59 = vmatpush.msra.mxu0 0.0
    %60 = vmatpush.msra.mxu0 0.0
    %61 = vmatpush.msra.mxu0 0.0
    %62 = vmatpush.msra.mxu0 0.0
    %63 = vmatpush.msra.mxu0 0.0
    %64 = vmatpush.msra.mxu0 0.0
    %65 = vmatpush.msra.mxu0 0.0
    %66 = vmatpush.msra.mxu0 0.0
    %67 = vmatpush.msra.mxu0 0.0
    %68 = vmatpush.msra.mxu0 0.0
    %69 = vmatpush.msra.mxu0 0.0
    %70 = vmatpush.msra.mxu0 0.0
    %v71 = vand.u32 %v54, 4294901760
    %72 = vmatpush.msra.mxu0 %v71
    %v73 = vand.u32 %v50, 4294901760
    %v74 = vsub.f32 %v50, %v73
    %v75 = vand.u32 %v74, 4294901760
    %v76 = vsub.f32 %v74, %v75
    %v77 = vand.u32 %v76, 4294901760
    %78 = vmatmul.f32.gmra.mxu0 %v77
    %v79 = vpop.f32.mrf.mxu0
    %v80 = vadd.f32 %v46, %v79
    %81 = vdwg.mxu0
    %82 = vmatpush.msra.mxu0 0.0
    %83 = vmatpush.msra.mxu0 0.0
    %84 = vmatpush.msra.mxu0 0.0
    %85 = vmatpush.msra.mxu0 0.0
    %86 = vmatpush.msra.mxu0 0.0
    %87 = vmatpush.msra.mxu0 0.0
    %88 = vmatpush.msra.mxu0 0.0
    %89 = vmatpush.msra.mxu0 0.0
    %90 = vmatpush.msra.mxu0 0.0
    %91 = vmatpush.msra.mxu0 0.0
    %92 = vmatpush.msra.mxu0 0.0
    %93 = vmatpush.msra.mxu0 0.0
    %94 = vmatpush.msra.mxu0 0.0
    %95 = vmatpush.msra.mxu0 0.0
    %96 = vmatpush.msra.mxu0 0.0
    %v97 = vand.u32 %v54, 4294901760
    %v98 = vsub.f32 %v54, %v97
    %v99 = vand.u32 %v98, 4294901760
    %v100 = vsub.f32 %v98, %v99
    %v101 = vand.u32 %v100, 4294901760
    %102 = vmatpush.msra.mxu0 %v101
    %v103 = vand.u32 %v50, 4294901760
    %104 = vmatmul.f32.gmra.mxu0 %v103
    %v105 = vpop.f32.mrf.mxu0
    %v106 = vadd.f32 %v80, %v105
    %107 = vdwg.mxu0
    %108 = vmatpush.msra.mxu0 0.0
    %109 = vmatpush.msra.mxu0 0.0
    %110 = vmatpush.msra.mxu0 0.0
    %111 = vmatpush.msra.mxu0 0.0
    %112 = vmatpush.msra.mxu0 0.0
    %113 = vmatpush.msra.mxu0 0.0
    %114 = vmatpush.msra.mxu0 0.0
    %115 = vmatpush.msra.mxu0 0.0
    %116 = vmatpush.msra.mxu0 0.0
    %117 = vmatpush.msra.mxu0 0.0
    %118 = vmatpush.msra.mxu0 0.0
    %119 = vmatpush.msra.mxu0 0.0
    %120 = vmatpush.msra.mxu0 0.0
    %121 = vmatpush.msra.mxu0 0.0
    %122 = vmatpush.msra.mxu0 0.0
    %v123 = vand.u32 %v54, 4294901760
    %v124 = vsub.f32 %v54, %v123
    %125 = vmatpush.msra.mxu0 %v124
    %v126 = vand.u32 %v50, 4294901760
    %v127 = vsub.f32 %v50, %v126
    %128 = vmatmul.f32.gmra.mxu0 %v127
    %v129 = vpop.f32.mrf.mxu0
    %v130 = vadd.f32 %v106, %v129
    %131 = vdwg.mxu0
    %132 = vmatpush.msra.mxu0 0.0
    %133 = vmatpush.msra.mxu0 0.0
    %134 = vmatpush.msra.mxu0 0.0
    %135 = vmatpush.msra.mxu0 0.0
    %136 = vmatpush.msra.mxu0 0.0
    %137 = vmatpush.msra.mxu0 0.0
    %138 = vmatpush.msra.mxu0 0.0
    %139 = vmatpush.msra.mxu0 0.0
    %140 = vmatpush.msra.mxu0 0.0
    %141 = vmatpush.msra.mxu0 0.0
    %142 = vmatpush.msra.mxu0 0.0
    %143 = vmatpush.msra.mxu0 0.0
    %144 = vmatpush.msra.mxu0 0.0
    %145 = vmatpush.msra.mxu0 0.0
    %146 = vmatpush.msra.mxu0 0.0
    %v147 = vand.u32 %v54, 4294901760
    %148 = vmatpush.msra.mxu0 %v147
    %v149 = vand.u32 %v50, 4294901760
    %v150 = vsub.f32 %v50, %v149
    %v151 = vand.u32 %v150, 4294901760
    %152 = vmatmul.f32.gmra.mxu0 %v151
    %v153 = vpop.f32.mrf.mxu0
    %v154 = vadd.f32 %v130, %v153
    %155 = vdwg.mxu0
    %156 = vmatpush.msra.mxu0 0.0
    %157 = vmatpush.msra.mxu0 0.0
    %158 = vmatpush.msra.mxu0 0.0
    %159 = vmatpush.msra.mxu0 0.0
    %160 = vmatpush.msra.mxu0 0.0
    %161 = vmatpush.msra.mxu0 0.0
    %162 = vmatpush.msra.mxu0 0.0
    %163 = vmatpush.msra.mxu0 0.0
    %164 = vmatpush.msra.mxu0 0.0
    %165 = vmatpush.msra.mxu0 0.0
    %166 = vmatpush.msra.mxu0 0.0
    %167 = vmatpush.msra.mxu0 0.0
    %168 = vmatpush.msra.mxu0 0.0
    %169 = vmatpush.msra.mxu0 0.0
    %170 = vmatpush.msra.mxu0 0.0
    %v171 = vand.u32 %v54, 4294901760
    %v172 = vsub.f32 %v54, %v171
    %v173 = vand.u32 %v172, 4294901760
    %174 = vmatpush.msra.mxu0 %v173
    %v175 = vand.u32 %v50, 4294901760
    %176 = vmatmul.f32.gmra.mxu0 %v175
    %v177 = vpop.f32.mrf.mxu0
    %v178 = vadd.f32 %v154, %v177
    %179 = vdwg.mxu0
    %180 = vmatpush.msra.mxu0 0.0
    %181 = vmatpush.msra.mxu0 0.0
    %182 = vmatpush.msra.mxu0 0.0
    %183 = vmatpush.msra.mxu0 0.0
    %184 = vmatpush.msra.mxu0 0.0
    %185 = vmatpush.msra.mxu0 0.0
    %186 = vmatpush.msra.mxu0 0.0
    %187 = vmatpush.msra.mxu0 0.0
    %188 = vmatpush.msra.mxu0 0.0
    %189 = vmatpush.msra.mxu0 0.0
    %190 = vmatpush.msra.mxu0 0.0
    %191 = vmatpush.msra.mxu0 0.0
    %192 = vmatpush.msra.mxu0 0.0
    %193 = vmatpush.msra.mxu0 0.0
    %194 = vmatpush.msra.mxu0 0.0
    %v195 = vand.u32 %v54, 4294901760
    %196 = vmatpush.msra.mxu0 %v195
    %v197 = vand.u32 %v50, 4294901760
    %198 = vmatmul.f32.gmra.mxu0 %v197
    %v199 = vpop.f32.mrf.mxu0
    %v200 = vadd.f32 %v178, %v199
    %201 = vdwg.mxu0
    %v202 = vtanh.pop %v200
    %v203 = vld [vmem:[#allocation2] sm:$0xff]
    %v204 = vld [vmem:[#allocation2 + $0x8] sm:$0xff]
    %v205 = vld [vmem:[#allocation2 + $0x10] sm:$0xff]
    %v206 = vld [vmem:[#allocation2 + $0x18] sm:$0xff]
    %v207 = vld [vmem:[%s4] sm:$0x1]
    %v209 = vperm.slane %v207, 0
    %vm211 = vcmask 261120
    %v213 = vsel %vm211, %v202, 0
    %215 = vmatpush.msra.mxu0 0.0
    %216 = vmatpush.msra.mxu0 0.0
    %217 = vmatpush.msra.mxu0 0.0
    %218 = vmatpush.msra.mxu0 0.0
    %219 = vmatpush.msra.mxu0 0.0
    %220 = vmatpush.msra.mxu0 0.0
    %221 = vmatpush.msra.mxu0 0.0
    %222 = vmatpush.msra.mxu0 0.0
    %223 = vmatpush.msra.mxu0 0.0
    %224 = vmatpush.msra.mxu0 0.0
    %225 = vmatpush.msra.mxu0 0.0
    %226 = vmatpush.msra.mxu0 0.0
    %v227 = vand.u32 %v206, 4294901760
    %228 = vmatpush.msra.mxu0 %v227
    %v229 = vand.u32 %v205, 4294901760
    %230 = vmatpush.msra.mxu0 %v229
    %v231 = vand.u32 %v204, 4294901760
    %232 = vmatpush.msra.mxu0 %v231
    %v233 = vand.u32 %v203, 4294901760
    %234 = vmatpush.msra.mxu0 %v233
    %v235 = vand.u32 %v213, 4294901760
    %v236 = vsub.f32 %v213, %v235
    %v237 = vand.u32 %v236, 4294901760
    %v238 = vsub.f32 %v236, %v237
    %v239 = vand.u32 %v238, 4294901760
    %240 = vmatmul.f32.gmra.mxu0 %v239
    %v241 = vpop.f32.mrf.mxu0
    %v242 = vadd.f32 %v209, %v241
    %243 = vdwg.mxu0
    %244 = vmatpush.msra.mxu0 0.0
    %245 = vmatpush.msra.mxu0 0.0
    %246 = vmatpush.msra.mxu0 0.0
    %247 = vmatpush.msra.mxu0 0.0
    %248 = vmatpush.msra.mxu0 0.0
    %249 = vmatpush.msra.mxu0 0.0
    %250 = vmatpush.msra.mxu0 0.0
    %251 = vmatpush.msra.mxu0 0.0
    %252 = vmatpush.msra.mxu0 0.0
    %253 = vmatpush.msra.mxu0 0.0
    %254 = vmatpush.msra.mxu0 0.0
    %255 = vmatpush.msra.mxu0 0.0
    %v256 = vand.u32 %v206, 4294901760
    %v257 = vsub.f32 %v206, %v256
    %v258 = vand.u32 %v257, 4294901760
    %v259 = vsub.f32 %v257, %v258
    %v260 = vand.u32 %v259, 4294901760
    %261 = vmatpush.msra.mxu0 %v260
    %v262 = vand.u32 %v205, 4294901760
    %v263 = vsub.f32 %v205, %v262
    %v264 = vand.u32 %v263, 4294901760
    %v265 = vsub.f32 %v263, %v264
    %v266 = vand.u32 %v265, 4294901760
    %267 = vmatpush.msra.mxu0 %v266
    %v268 = vand.u32 %v204, 4294901760
    %v269 = vsub.f32 %v204, %v268
    %v270 = vand.u32 %v269, 4294901760
    %v271 = vsub.f32 %v269, %v270
    %v272 = vand.u32 %v271, 4294901760
    %273 = vmatpush.msra.mxu0 %v272
    %v274 = vand.u32 %v203, 4294901760
    %v275 = vsub.f32 %v203, %v274
    %v276 = vand.u32 %v275, 4294901760
    %v277 = vsub.f32 %v275, %v276
    %v278 = vand.u32 %v277, 4294901760
    %279 = vmatpush.msra.mxu0 %v278
    %v280 = vand.u32 %v213, 4294901760
    %281 = vmatmul.f32.gmra.mxu0 %v280
    %v282 = vpop.f32.mrf.mxu0
    %v283 = vadd.f32 %v242, %v282
    %284 = vdwg.mxu0
    %285 = vmatpush.msra.mxu0 0.0
    %286 = vmatpush.msra.mxu0 0.0
    %287 = vmatpush.msra.mxu0 0.0
    %288 = vmatpush.msra.mxu0 0.0
    %289 = vmatpush.msra.mxu0 0.0
    %290 = vmatpush.msra.mxu0 0.0
    %291 = vmatpush.msra.mxu0 0.0
    %292 = vmatpush.msra.mxu0 0.0
    %293 = vmatpush.msra.mxu0 0.0
    %294 = vmatpush.msra.mxu0 0.0
    %295 = vmatpush.msra.mxu0 0.0
    %296 = vmatpush.msra.mxu0 0.0
    %v297 = vand.u32 %v206, 4294901760
    %v298 = vsub.f32 %v206, %v297
    %299 = vmatpush.msra.mxu0 %v298
    %v300 = vand.u32 %v205, 4294901760
    %v301 = vsub.f32 %v205, %v300
    %302 = vmatpush.msra.mxu0 %v301
    %v303 = vand.u32 %v204, 4294901760
    %v304 = vsub.f32 %v204, %v303
    %305 = vmatpush.msra.mxu0 %v304
    %v306 = vand.u32 %v203, 4294901760
    %v307 = vsub.f32 %v203, %v306
    %308 = vmatpush.msra.mxu0 %v307
    %v309 = vand.u32 %v213, 4294901760
    %v310 = vsub.f32 %v213, %v309
    %311 = vmatmul.f32.gmra.mxu0 %v310
    %v312 = vpop.f32.mrf.mxu0
    %v313 = vadd.f32 %v283, %v312
    %314 = vdwg.mxu0
    %315 = vmatpush.msra.mxu0 0.0
    %316 = vmatpush.msra.mxu0 0.0
    %317 = vmatpush.msra.mxu0 0.0
    %318 = vmatpush.msra.mxu0 0.0
    %319 = vmatpush.msra.mxu0 0.0
    %320 = vmatpush.msra.mxu0 0.0
    %321 = vmatpush.msra.mxu0 0.0
    %322 = vmatpush.msra.mxu0 0.0
    %323 = vmatpush.msra.mxu0 0.0
    %324 = vmatpush.msra.mxu0 0.0
    %325 = vmatpush.msra.mxu0 0.0
    %326 = vmatpush.msra.mxu0 0.0
    %v327 = vand.u32 %v206, 4294901760
    %328 = vmatpush.msra.mxu0 %v327
    %v329 = vand.u32 %v205, 4294901760
    %330 = vmatpush.msra.mxu0 %v329
    %v331 = vand.u32 %v204, 4294901760
    %332 = vmatpush.msra.mxu0 %v331
    %v333 = vand.u32 %v203, 4294901760
    %334 = vmatpush.msra.mxu0 %v333
    %v335 = vand.u32 %v213, 4294901760
    %v336 = vsub.f32 %v213, %v335
    %v337 = vand.u32 %v336, 4294901760
    %338 = vmatmul.f32.gmra.mxu0 %v337
    %v339 = vpop.f32.mrf.mxu0
    %v340 = vadd.f32 %v313, %v339
    %341 = vdwg.mxu0
    %342 = vmatpush.msra.mxu0 0.0
    %343 = vmatpush.msra.mxu0 0.0
    %344 = vmatpush.msra.mxu0 0.0
    %345 = vmatpush.msra.mxu0 0.0
    %346 = vmatpush.msra.mxu0 0.0
    %347 = vmatpush.msra.mxu0 0.0
    %348 = vmatpush.msra.mxu0 0.0
    %349 = vmatpush.msra.mxu0 0.0
    %350 = vmatpush.msra.mxu0 0.0
    %351 = vmatpush.msra.mxu0 0.0
    %352 = vmatpush.msra.mxu0 0.0
    %353 = vmatpush.msra.mxu0 0.0
    %v354 = vand.u32 %v206, 4294901760
    %v355 = vsub.f32 %v206, %v354
    %v356 = vand.u32 %v355, 4294901760
    %357 = vmatpush.msra.mxu0 %v356
    %v358 = vand.u32 %v205, 4294901760
    %v359 = vsub.f32 %v205, %v358
    %v360 = vand.u32 %v359, 4294901760
    %361 = vmatpush.msra.mxu0 %v360
    %v362 = vand.u32 %v204, 4294901760
    %v363 = vsub.f32 %v204, %v362
    %v364 = vand.u32 %v363, 4294901760
    %365 = vmatpush.msra.mxu0 %v364
    %v366 = vand.u32 %v203, 4294901760
    %v367 = vsub.f32 %v203, %v366
    %v368 = vand.u32 %v367, 4294901760
    %369 = vmatpush.msra.mxu0 %v368
    %v370 = vand.u32 %v213, 4294901760
    %371 = vmatmul.f32.gmra.mxu0 %v370
    %v372 = vpop.f32.mrf.mxu0
    %v373 = vadd.f32 %v340, %v372
    %374 = vdwg.mxu0
    %375 = vmatpush.msra.mxu0 0.0
    %376 = vmatpush.msra.mxu0 0.0
    %377 = vmatpush.msra.mxu0 0.0
    %378 = vmatpush.msra.mxu0 0.0
    %379 = vmatpush.msra.mxu0 0.0
    %380 = vmatpush.msra.mxu0 0.0
    %381 = vmatpush.msra.mxu0 0.0
    %382 = vmatpush.msra.mxu0 0.0
    %383 = vmatpush.msra.mxu0 0.0
    %384 = vmatpush.msra.mxu0 0.0
    %385 = vmatpush.msra.mxu0 0.0
    %386 = vmatpush.msra.mxu0 0.0
    %v387 = vand.u32 %v206, 4294901760
    %388 = vmatpush.msra.mxu0 %v387
    %v389 = vand.u32 %v205, 4294901760
    %390 = vmatpush.msra.mxu0 %v389
    %v391 = vand.u32 %v204, 4294901760
    %392 = vmatpush.msra.mxu0 %v391
    %v393 = vand.u32 %v203, 4294901760
    %394 = vmatpush.msra.mxu0 %v393
    %v395 = vand.u32 %v213, 4294901760
    %396 = vmatmul.f32.gmra.mxu0 %v395
    %v397 = vpop.f32.mrf.mxu0
    %v398 = vadd.f32 %v373, %v397
    %399 = vdwg.mxu0
    %v400 = vtanh.pop %v398
    %s401 = scalar_lea.vmem [#allocation2], 32
    %v402 = vld [vmem:[%s401] sm:$0xff]
    %v403 = vld [vmem:[%s401 + $0x8] sm:$0xff]
    %v404 = vld [vmem:[%s401 + $0x10] sm:$0xff]
    %v405 = vld [vmem:[%s401 + $0x18] sm:$0xff]
    %s406 = scalar_lea.vmem %s4, 1
    %v407 = vld [vmem:[%s406] sm:$0x1]
    %v409 = vperm.slane %v407, 0
    %v412 = vsel %vm211, %v400, 0
    %414 = vmatpush.msra.mxu0 0.0
    %415 = vmatpush.msra.mxu0 0.0
    %416 = vmatpush.msra.mxu0 0.0
    %417 = vmatpush.msra.mxu0 0.0
    %418 = vmatpush.msra.mxu0 0.0
    %419 = vmatpush.msra.mxu0 0.0
    %420 = vmatpush.msra.mxu0 0.0
    %421 = vmatpush.msra.mxu0 0.0
    %422 = vmatpush.msra.mxu0 0.0
    %423 = vmatpush.msra.mxu0 0.0
    %424 = vmatpush.msra.mxu0 0.0
    %425 = vmatpush.msra.mxu0 0.0
    %v426 = vand.u32 %v405, 4294901760
    %427 = vmatpush.msra.mxu0 %v426
    %v428 = vand.u32 %v404, 4294901760
    %429 = vmatpush.msra.mxu0 %v428
    %v430 = vand.u32 %v403, 4294901760
    %431 = vmatpush.msra.mxu0 %v430
    %v432 = vand.u32 %v402, 4294901760
    %433 = vmatpush.msra.mxu0 %v432
    %v434 = vand.u32 %v412, 4294901760
    %v435 = vsub.f32 %v412, %v434
    %v436 = vand.u32 %v435, 4294901760
    %v437 = vsub.f32 %v435, %v436
    %v438 = vand.u32 %v437, 4294901760
    %439 = vmatmul.f32.gmra.mxu0 %v438
    %v440 = vpop.f32.mrf.mxu0
    %v441 = vadd.f32 %v409, %v440
    %442 = vdwg.mxu0
    %443 = vmatpush.msra.mxu0 0.0
    %444 = vmatpush.msra.mxu0 0.0
    %445 = vmatpush.msra.mxu0 0.0
    %446 = vmatpush.msra.mxu0 0.0
    %447 = vmatpush.msra.mxu0 0.0
    %448 = vmatpush.msra.mxu0 0.0
    %449 = vmatpush.msra.mxu0 0.0
    %450 = vmatpush.msra.mxu0 0.0
    %451 = vmatpush.msra.mxu0 0.0
    %452 = vmatpush.msra.mxu0 0.0
    %453 = vmatpush.msra.mxu0 0.0
    %454 = vmatpush.msra.mxu0 0.0
    %v455 = vand.u32 %v405, 4294901760
    %v456 = vsub.f32 %v405, %v455
    %v457 = vand.u32 %v456, 4294901760
    %v458 = vsub.f32 %v456, %v457
    %v459 = vand.u32 %v458, 4294901760
    %460 = vmatpush.msra.mxu0 %v459
    %v461 = vand.u32 %v404, 4294901760
    %v462 = vsub.f32 %v404, %v461
    %v463 = vand.u32 %v462, 4294901760
    %v464 = vsub.f32 %v462, %v463
    %v465 = vand.u32 %v464, 4294901760
    %466 = vmatpush.msra.mxu0 %v465
    %v467 = vand.u32 %v403, 4294901760
    %v468 = vsub.f32 %v403, %v467
    %v469 = vand.u32 %v468, 4294901760
    %v470 = vsub.f32 %v468, %v469
    %v471 = vand.u32 %v470, 4294901760
    %472 = vmatpush.msra.mxu0 %v471
    %v473 = vand.u32 %v402, 4294901760
    %v474 = vsub.f32 %v402, %v473
    %v475 = vand.u32 %v474, 4294901760
    %v476 = vsub.f32 %v474, %v475
    %v477 = vand.u32 %v476, 4294901760
    %478 = vmatpush.msra.mxu0 %v477
    %v479 = vand.u32 %v412, 4294901760
    %480 = vmatmul.f32.gmra.mxu0 %v479
    %v481 = vpop.f32.mrf.mxu0
    %v482 = vadd.f32 %v441, %v481
    %483 = vdwg.mxu0
    %484 = vmatpush.msra.mxu0 0.0
    %485 = vmatpush.msra.mxu0 0.0
    %486 = vmatpush.msra.mxu0 0.0
    %487 = vmatpush.msra.mxu0 0.0
    %488 = vmatpush.msra.mxu0 0.0
    %489 = vmatpush.msra.mxu0 0.0
    %490 = vmatpush.msra.mxu0 0.0
    %491 = vmatpush.msra.mxu0 0.0
    %492 = vmatpush.msra.mxu0 0.0
    %493 = vmatpush.msra.mxu0 0.0
    %494 = vmatpush.msra.mxu0 0.0
    %495 = vmatpush.msra.mxu0 0.0
    %v496 = vand.u32 %v405, 4294901760
    %v497 = vsub.f32 %v405, %v496
    %498 = vmatpush.msra.mxu0 %v497
    %v499 = vand.u32 %v404, 4294901760
    %v500 = vsub.f32 %v404, %v499
    %501 = vmatpush.msra.mxu0 %v500
    %v502 = vand.u32 %v403, 4294901760
    %v503 = vsub.f32 %v403, %v502
    %504 = vmatpush.msra.mxu0 %v503
    %v505 = vand.u32 %v402, 4294901760
    %v506 = vsub.f32 %v402, %v505
    %507 = vmatpush.msra.mxu0 %v506
    %v508 = vand.u32 %v412, 4294901760
    %v509 = vsub.f32 %v412, %v508
    %510 = vmatmul.f32.gmra.mxu0 %v509
    %v511 = vpop.f32.mrf.mxu0
    %v512 = vadd.f32 %v482, %v511
    %513 = vdwg.mxu0
    %514 = vmatpush.msra.mxu0 0.0
    %515 = vmatpush.msra.mxu0 0.0
    %516 = vmatpush.msra.mxu0 0.0
    %517 = vmatpush.msra.mxu0 0.0
    %518 = vmatpush.msra.mxu0 0.0
    %519 = vmatpush.msra.mxu0 0.0
    %520 = vmatpush.msra.mxu0 0.0
    %521 = vmatpush.msra.mxu0 0.0
    %522 = vmatpush.msra.mxu0 0.0
    %523 = vmatpush.msra.mxu0 0.0
    %524 = vmatpush.msra.mxu0 0.0
    %525 = vmatpush.msra.mxu0 0.0
    %v526 = vand.u32 %v405, 4294901760
    %527 = vmatpush.msra.mxu0 %v526
    %v528 = vand.u32 %v404, 4294901760
    %529 = vmatpush.msra.mxu0 %v528
    %v530 = vand.u32 %v403, 4294901760
    %531 = vmatpush.msra.mxu0 %v530
    %v532 = vand.u32 %v402, 4294901760
    %533 = vmatpush.msra.mxu0 %v532
    %v534 = vand.u32 %v412, 4294901760
    %v535 = vsub.f32 %v412, %v534
    %v536 = vand.u32 %v535, 4294901760
    %537 = vmatmul.f32.gmra.mxu0 %v536
    %v538 = vpop.f32.mrf.mxu0
    %v539 = vadd.f32 %v512, %v538
    %540 = vdwg.mxu0
    %541 = vmatpush.msra.mxu0 0.0
    %542 = vmatpush.msra.mxu0 0.0
    %543 = vmatpush.msra.mxu0 0.0
    %544 = vmatpush.msra.mxu0 0.0
    %545 = vmatpush.msra.mxu0 0.0
    %546 = vmatpush.msra.mxu0 0.0
    %547 = vmatpush.msra.mxu0 0.0
    %548 = vmatpush.msra.mxu0 0.0
    %549 = vmatpush.msra.mxu0 0.0
    %550 = vmatpush.msra.mxu0 0.0
    %551 = vmatpush.msra.mxu0 0.0
    %552 = vmatpush.msra.mxu0 0.0
    %v553 = vand.u32 %v405, 4294901760
    %v554 = vsub.f32 %v405, %v553
    %v555 = vand.u32 %v554, 4294901760
    %556 = vmatpush.msra.mxu0 %v555
    %v557 = vand.u32 %v404, 4294901760
    %v558 = vsub.f32 %v404, %v557
    %v559 = vand.u32 %v558, 4294901760
    %560 = vmatpush.msra.mxu0 %v559
    %v561 = vand.u32 %v403, 4294901760
    %v562 = vsub.f32 %v403, %v561
    %v563 = vand.u32 %v562, 4294901760
    %564 = vmatpush.msra.mxu0 %v563
    %v565 = vand.u32 %v402, 4294901760
    %v566 = vsub.f32 %v402, %v565
    %v567 = vand.u32 %v566, 4294901760
    %568 = vmatpush.msra.mxu0 %v567
    %v569 = vand.u32 %v412, 4294901760
    %570 = vmatmul.f32.gmra.mxu0 %v569
    %v571 = vpop.f32.mrf.mxu0
    %v572 = vadd.f32 %v539, %v571
    %573 = vdwg.mxu0
    %574 = vmatpush.msra.mxu0 0.0
    %575 = vmatpush.msra.mxu0 0.0
    %576 = vmatpush.msra.mxu0 0.0
    %577 = vmatpush.msra.mxu0 0.0
    %578 = vmatpush.msra.mxu0 0.0
    %579 = vmatpush.msra.mxu0 0.0
    %580 = vmatpush.msra.mxu0 0.0
    %581 = vmatpush.msra.mxu0 0.0
    %582 = vmatpush.msra.mxu0 0.0
    %583 = vmatpush.msra.mxu0 0.0
    %584 = vmatpush.msra.mxu0 0.0
    %585 = vmatpush.msra.mxu0 0.0
    %v586 = vand.u32 %v405, 4294901760
    %587 = vmatpush.msra.mxu0 %v586
    %v588 = vand.u32 %v404, 4294901760
    %589 = vmatpush.msra.mxu0 %v588
    %v590 = vand.u32 %v403, 4294901760
    %591 = vmatpush.msra.mxu0 %v590
    %v592 = vand.u32 %v402, 4294901760
    %593 = vmatpush.msra.mxu0 %v592
    %v594 = vand.u32 %v412, 4294901760
    %595 = vmatmul.f32.gmra.mxu0 %v594
    %v596 = vpop.f32.mrf.mxu0
    %v597 = vadd.f32 %v572, %v596
    %598 = vdwg.mxu0
    %v599 = vtanh.pop %v597
    %s600 = scalar_lea.vmem [#allocation2], 64
    %v601 = vld [vmem:[%s600] sm:$0xff]
    %v602 = vld [vmem:[%s600 + $0x8] sm:$0xff]
    %v603 = vld [vmem:[%s600 + $0x10] sm:$0xff]
    %v604 = vld [vmem:[%s600 + $0x18] sm:$0xff]
    %s605 = scalar_lea.vmem %s4, 2
    %v606 = vld [vmem:[%s605] sm:$0x1]
    %v608 = vperm.slane %v606, 0
    %v611 = vsel %vm211, %v599, 0
    %613 = vmatpush.msra.mxu0 0.0
    %614 = vmatpush.msra.mxu0 0.0
    %615 = vmatpush.msra.mxu0 0.0
    %616 = vmatpush.msra.mxu0 0.0
    %617 = vmatpush.msra.mxu0 0.0
    %618 = vmatpush.msra.mxu0 0.0
    %619 = vmatpush.msra.mxu0 0.0
    %620 = vmatpush.msra.mxu0 0.0
    %621 = vmatpush.msra.mxu0 0.0
    %622 = vmatpush.msra.mxu0 0.0
    %623 = vmatpush.msra.mxu0 0.0
    %624 = vmatpush.msra.mxu0 0.0
    %v625 = vand.u32 %v604, 4294901760
    %626 = vmatpush.msra.mxu0 %v625
    %v627 = vand.u32 %v603, 4294901760
    %628 = vmatpush.msra.mxu0 %v627
    %v629 = vand.u32 %v602, 4294901760
    %630 = vmatpush.msra.mxu0 %v629
    %v631 = vand.u32 %v601, 4294901760
    %632 = vmatpush.msra.mxu0 %v631
    %v633 = vand.u32 %v611, 4294901760
    %v634 = vsub.f32 %v611, %v633
    %v635 = vand.u32 %v634, 4294901760
    %v636 = vsub.f32 %v634, %v635
    %v637 = vand.u32 %v636, 4294901760
    %638 = vmatmul.f32.gmra.mxu0 %v637
    %v639 = vpop.f32.mrf.mxu0
    %v640 = vadd.f32 %v608, %v639
    %641 = vdwg.mxu0
    %642 = vmatpush.msra.mxu0 0.0
    %643 = vmatpush.msra.mxu0 0.0
    %644 = vmatpush.msra.mxu0 0.0
    %645 = vmatpush.msra.mxu0 0.0
    %646 = vmatpush.msra.mxu0 0.0
    %647 = vmatpush.msra.mxu0 0.0
    %648 = vmatpush.msra.mxu0 0.0
    %649 = vmatpush.msra.mxu0 0.0
    %650 = vmatpush.msra.mxu0 0.0
    %651 = vmatpush.msra.mxu0 0.0
    %652 = vmatpush.msra.mxu0 0.0
    %653 = vmatpush.msra.mxu0 0.0
    %v654 = vand.u32 %v604, 4294901760
    %v655 = vsub.f32 %v604, %v654
    %v656 = vand.u32 %v655, 4294901760
    %v657 = vsub.f32 %v655, %v656
    %v658 = vand.u32 %v657, 4294901760
    %659 = vmatpush.msra.mxu0 %v658
    %v660 = vand.u32 %v603, 4294901760
    %v661 = vsub.f32 %v603, %v660
    %v662 = vand.u32 %v661, 4294901760
    %v663 = vsub.f32 %v661, %v662
    %v664 = vand.u32 %v663, 4294901760
    %665 = vmatpush.msra.mxu0 %v664
    %v666 = vand.u32 %v602, 4294901760
    %v667 = vsub.f32 %v602, %v666
    %v668 = vand.u32 %v667, 4294901760
    %v669 = vsub.f32 %v667, %v668
    %v670 = vand.u32 %v669, 4294901760
    %671 = vmatpush.msra.mxu0 %v670
    %v672 = vand.u32 %v601, 4294901760
    %v673 = vsub.f32 %v601, %v672
    %v674 = vand.u32 %v673, 4294901760
    %v675 = vsub.f32 %v673, %v674
    %v676 = vand.u32 %v675, 4294901760
    %677 = vmatpush.msra.mxu0 %v676
    %v678 = vand.u32 %v611, 4294901760
    %679 = vmatmul.f32.gmra.mxu0 %v678
    %v680 = vpop.f32.mrf.mxu0
    %v681 = vadd.f32 %v640, %v680
    %682 = vdwg.mxu0
    %683 = vmatpush.msra.mxu0 0.0
    %684 = vmatpush.msra.mxu0 0.0
    %685 = vmatpush.msra.mxu0 0.0
    %686 = vmatpush.msra.mxu0 0.0
    %687 = vmatpush.msra.mxu0 0.0
    %688 = vmatpush.msra.mxu0 0.0
    %689 = vmatpush.msra.mxu0 0.0
    %690 = vmatpush.msra.mxu0 0.0
    %691 = vmatpush.msra.mxu0 0.0
    %692 = vmatpush.msra.mxu0 0.0
    %693 = vmatpush.msra.mxu0 0.0
    %694 = vmatpush.msra.mxu0 0.0
    %v695 = vand.u32 %v604, 4294901760
    %v696 = vsub.f32 %v604, %v695
    %697 = vmatpush.msra.mxu0 %v696
    %v698 = vand.u32 %v603, 4294901760
    %v699 = vsub.f32 %v603, %v698
    %700 = vmatpush.msra.mxu0 %v699
    %v701 = vand.u32 %v602, 4294901760
    %v702 = vsub.f32 %v602, %v701
    %703 = vmatpush.msra.mxu0 %v702
    %v704 = vand.u32 %v601, 4294901760
    %v705 = vsub.f32 %v601, %v704
    %706 = vmatpush.msra.mxu0 %v705
    %v707 = vand.u32 %v611, 4294901760
    %v708 = vsub.f32 %v611, %v707
    %709 = vmatmul.f32.gmra.mxu0 %v708
    %v710 = vpop.f32.mrf.mxu0
    %v711 = vadd.f32 %v681, %v710
    %712 = vdwg.mxu0
    %713 = vmatpush.msra.mxu0 0.0
    %714 = vmatpush.msra.mxu0 0.0
    %715 = vmatpush.msra.mxu0 0.0
    %716 = vmatpush.msra.mxu0 0.0
    %717 = vmatpush.msra.mxu0 0.0
    %718 = vmatpush.msra.mxu0 0.0
    %719 = vmatpush.msra.mxu0 0.0
    %720 = vmatpush.msra.mxu0 0.0
    %721 = vmatpush.msra.mxu0 0.0
    %722 = vmatpush.msra.mxu0 0.0
    %723 = vmatpush.msra.mxu0 0.0
    %724 = vmatpush.msra.mxu0 0.0
    %v725 = vand.u32 %v604, 4294901760
    %726 = vmatpush.msra.mxu0 %v725
    %v727 = vand.u32 %v603, 4294901760
    %728 = vmatpush.msra.mxu0 %v727
    %v729 = vand.u32 %v602, 4294901760
    %730 = vmatpush.msra.mxu0 %v729
    %v731 = vand.u32 %v601, 4294901760
    %732 = vmatpush.msra.mxu0 %v731
    %v733 = vand.u32 %v611, 4294901760
    %v734 = vsub.f32 %v611, %v733
    %v735 = vand.u32 %v734, 4294901760
    %736 = vmatmul.f32.gmra.mxu0 %v735
    %v737 = vpop.f32.mrf.mxu0
    %v738 = vadd.f32 %v711, %v737
    %739 = vdwg.mxu0
    %740 = vmatpush.msra.mxu0 0.0
    %741 = vmatpush.msra.mxu0 0.0
    %742 = vmatpush.msra.mxu0 0.0
    %743 = vmatpush.msra.mxu0 0.0
    %744 = vmatpush.msra.mxu0 0.0
    %745 = vmatpush.msra.mxu0 0.0
    %746 = vmatpush.msra.mxu0 0.0
    %747 = vmatpush.msra.mxu0 0.0
    %748 = vmatpush.msra.mxu0 0.0
    %749 = vmatpush.msra.mxu0 0.0
    %750 = vmatpush.msra.mxu0 0.0
    %751 = vmatpush.msra.mxu0 0.0
    %v752 = vand.u32 %v604, 4294901760
    %v753 = vsub.f32 %v604, %v752
    %v754 = vand.u32 %v753, 4294901760
    %755 = vmatpush.msra.mxu0 %v754
    %v756 = vand.u32 %v603, 4294901760
    %v757 = vsub.f32 %v603, %v756
    %v758 = vand.u32 %v757, 4294901760
    %759 = vmatpush.msra.mxu0 %v758
    %v760 = vand.u32 %v602, 4294901760
    %v761 = vsub.f32 %v602, %v760
    %v762 = vand.u32 %v761, 4294901760
    %763 = vmatpush.msra.mxu0 %v762
    %v764 = vand.u32 %v601, 4294901760
    %v765 = vsub.f32 %v601, %v764
    %v766 = vand.u32 %v765, 4294901760
    %767 = vmatpush.msra.mxu0 %v766
    %v768 = vand.u32 %v611, 4294901760
    %769 = vmatmul.f32.gmra.mxu0 %v768
    %v770 = vpop.f32.mrf.mxu0
    %v771 = vadd.f32 %v738, %v770
    %772 = vdwg.mxu0
    %773 = vmatpush.msra.mxu0 0.0
    %774 = vmatpush.msra.mxu0 0.0
    %775 = vmatpush.msra.mxu0 0.0
    %776 = vmatpush.msra.mxu0 0.0
    %777 = vmatpush.msra.mxu0 0.0
    %778 = vmatpush.msra.mxu0 0.0
    %779 = vmatpush.msra.mxu0 0.0
    %780 = vmatpush.msra.mxu0 0.0
    %781 = vmatpush.msra.mxu0 0.0
    %782 = vmatpush.msra.mxu0 0.0
    %783 = vmatpush.msra.mxu0 0.0
    %784 = vmatpush.msra.mxu0 0.0
    %v785 = vand.u32 %v604, 4294901760
    %786 = vmatpush.msra.mxu0 %v785
    %v787 = vand.u32 %v603, 4294901760
    %788 = vmatpush.msra.mxu0 %v787
    %v789 = vand.u32 %v602, 4294901760
    %790 = vmatpush.msra.mxu0 %v789
    %v791 = vand.u32 %v601, 4294901760
    %792 = vmatpush.msra.mxu0 %v791
    %v793 = vand.u32 %v611, 4294901760
    %794 = vmatmul.f32.gmra.mxu0 %v793
    %v795 = vpop.f32.mrf.mxu0
    %v796 = vadd.f32 %v771, %v795
    %797 = vdwg.mxu0
    %v798 = vtanh.pop %v796
    %s799 = scalar_lea.vmem [#allocation2], 96
    %v800 = vld [vmem:[%s799] sm:$0xff]
    %v801 = vld [vmem:[%s799 + $0x8] sm:$0xff]
    %v802 = vld [vmem:[%s799 + $0x10] sm:$0xff]
    %v803 = vld [vmem:[%s799 + $0x18] sm:$0xff]
    %s804 = scalar_lea.vmem %s4, 3
    %v805 = vld [vmem:[%s804] sm:$0x1]
    %v807 = vperm.slane %v805, 0
    %v810 = vsel %vm211, %v798, 0
    %812 = vmatpush.msra.mxu0 0.0
    %813 = vmatpush.msra.mxu0 0.0
    %814 = vmatpush.msra.mxu0 0.0
    %815 = vmatpush.msra.mxu0 0.0
    %816 = vmatpush.msra.mxu0 0.0
    %817 = vmatpush.msra.mxu0 0.0
    %818 = vmatpush.msra.mxu0 0.0
    %819 = vmatpush.msra.mxu0 0.0
    %820 = vmatpush.msra.mxu0 0.0
    %821 = vmatpush.msra.mxu0 0.0
    %822 = vmatpush.msra.mxu0 0.0
    %823 = vmatpush.msra.mxu0 0.0
    %v824 = vand.u32 %v803, 4294901760
    %825 = vmatpush.msra.mxu0 %v824
    %v826 = vand.u32 %v802, 4294901760
    %827 = vmatpush.msra.mxu0 %v826
    %v828 = vand.u32 %v801, 4294901760
    %829 = vmatpush.msra.mxu0 %v828
    %v830 = vand.u32 %v800, 4294901760
    %831 = vmatpush.msra.mxu0 %v830
    %v832 = vand.u32 %v810, 4294901760
    %v833 = vsub.f32 %v810, %v832
    %v834 = vand.u32 %v833, 4294901760
    %v835 = vsub.f32 %v833, %v834
    %v836 = vand.u32 %v835, 4294901760
    %837 = vmatmul.f32.gmra.mxu0 %v836
    %v838 = vpop.f32.mrf.mxu0
    %v839 = vadd.f32 %v807, %v838
    %840 = vdwg.mxu0
    %841 = vmatpush.msra.mxu0 0.0
    %842 = vmatpush.msra.mxu0 0.0
    %843 = vmatpush.msra.mxu0 0.0
    %844 = vmatpush.msra.mxu0 0.0
    %845 = vmatpush.msra.mxu0 0.0
    %846 = vmatpush.msra.mxu0 0.0
    %847 = vmatpush.msra.mxu0 0.0
    %848 = vmatpush.msra.mxu0 0.0
    %849 = vmatpush.msra.mxu0 0.0
    %850 = vmatpush.msra.mxu0 0.0
    %851 = vmatpush.msra.mxu0 0.0
    %852 = vmatpush.msra.mxu0 0.0
    %v853 = vand.u32 %v803, 4294901760
    %v854 = vsub.f32 %v803, %v853
    %v855 = vand.u32 %v854, 4294901760
    %v856 = vsub.f32 %v854, %v855
    %v857 = vand.u32 %v856, 4294901760
    %858 = vmatpush.msra.mxu0 %v857
    %v859 = vand.u32 %v802, 4294901760
    %v860 = vsub.f32 %v802, %v859
    %v861 = vand.u32 %v860, 4294901760
    %v862 = vsub.f32 %v860, %v861
    %v863 = vand.u32 %v862, 4294901760
    %864 = vmatpush.msra.mxu0 %v863
    %v865 = vand.u32 %v801, 4294901760
    %v866 = vsub.f32 %v801, %v865
    %v867 = vand.u32 %v866, 4294901760
    %v868 = vsub.f32 %v866, %v867
    %v869 = vand.u32 %v868, 4294901760
    %870 = vmatpush.msra.mxu0 %v869
    %v871 = vand.u32 %v800, 4294901760
    %v872 = vsub.f32 %v800, %v871
    %v873 = vand.u32 %v872, 4294901760
    %v874 = vsub.f32 %v872, %v873
    %v875 = vand.u32 %v874, 4294901760
    %876 = vmatpush.msra.mxu0 %v875
    %v877 = vand.u32 %v810, 4294901760
    %878 = vmatmul.f32.gmra.mxu0 %v877
    %v879 = vpop.f32.mrf.mxu0
    %v880 = vadd.f32 %v839, %v879
    %881 = vdwg.mxu0
    %882 = vmatpush.msra.mxu0 0.0
    %883 = vmatpush.msra.mxu0 0.0
    %884 = vmatpush.msra.mxu0 0.0
    %885 = vmatpush.msra.mxu0 0.0
    %886 = vmatpush.msra.mxu0 0.0
    %887 = vmatpush.msra.mxu0 0.0
    %888 = vmatpush.msra.mxu0 0.0
    %889 = vmatpush.msra.mxu0 0.0
    %890 = vmatpush.msra.mxu0 0.0
    %891 = vmatpush.msra.mxu0 0.0
    %892 = vmatpush.msra.mxu0 0.0
    %893 = vmatpush.msra.mxu0 0.0
    %v894 = vand.u32 %v803, 4294901760
    %v895 = vsub.f32 %v803, %v894
    %896 = vmatpush.msra.mxu0 %v895
    %v897 = vand.u32 %v802, 4294901760
    %v898 = vsub.f32 %v802, %v897
    %899 = vmatpush.msra.mxu0 %v898
    %v900 = vand.u32 %v801, 4294901760
    %v901 = vsub.f32 %v801, %v900
    %902 = vmatpush.msra.mxu0 %v901
    %v903 = vand.u32 %v800, 4294901760
    %v904 = vsub.f32 %v800, %v903
    %905 = vmatpush.msra.mxu0 %v904
    %v906 = vand.u32 %v810, 4294901760
    %v907 = vsub.f32 %v810, %v906
    %908 = vmatmul.f32.gmra.mxu0 %v907
    %v909 = vpop.f32.mrf.mxu0
    %v910 = vadd.f32 %v880, %v909
    %911 = vdwg.mxu0
    %912 = vmatpush.msra.mxu0 0.0
    %913 = vmatpush.msra.mxu0 0.0
    %914 = vmatpush.msra.mxu0 0.0
    %915 = vmatpush.msra.mxu0 0.0
    %916 = vmatpush.msra.mxu0 0.0
    %917 = vmatpush.msra.mxu0 0.0
    %918 = vmatpush.msra.mxu0 0.0
    %919 = vmatpush.msra.mxu0 0.0
    %920 = vmatpush.msra.mxu0 0.0
    %921 = vmatpush.msra.mxu0 0.0
    %922 = vmatpush.msra.mxu0 0.0
    %923 = vmatpush.msra.mxu0 0.0
    %v924 = vand.u32 %v803, 4294901760
    %925 = vmatpush.msra.mxu0 %v924
    %v926 = vand.u32 %v802, 4294901760
    %927 = vmatpush.msra.mxu0 %v926
    %v928 = vand.u32 %v801, 4294901760
    %929 = vmatpush.msra.mxu0 %v928
    %v930 = vand.u32 %v800, 4294901760
    %931 = vmatpush.msra.mxu0 %v930
    %v932 = vand.u32 %v810, 4294901760
    %v933 = vsub.f32 %v810, %v932
    %v934 = vand.u32 %v933, 4294901760
    %935 = vmatmul.f32.gmra.mxu0 %v934
    %v936 = vpop.f32.mrf.mxu0
    %v937 = vadd.f32 %v910, %v936
    %938 = vdwg.mxu0
    %939 = vmatpush.msra.mxu0 0.0
    %940 = vmatpush.msra.mxu0 0.0
    %941 = vmatpush.msra.mxu0 0.0
    %942 = vmatpush.msra.mxu0 0.0
    %943 = vmatpush.msra.mxu0 0.0
    %944 = vmatpush.msra.mxu0 0.0
    %945 = vmatpush.msra.mxu0 0.0
    %946 = vmatpush.msra.mxu0 0.0
    %947 = vmatpush.msra.mxu0 0.0
    %948 = vmatpush.msra.mxu0 0.0
    %949 = vmatpush.msra.mxu0 0.0
    %950 = vmatpush.msra.mxu0 0.0
    %v951 = vand.u32 %v803, 4294901760
    %v952 = vsub.f32 %v803, %v951
    %v953 = vand.u32 %v952, 4294901760
    %954 = vmatpush.msra.mxu0 %v953
    %v955 = vand.u32 %v802, 4294901760
    %v956 = vsub.f32 %v802, %v955
    %v957 = vand.u32 %v956, 4294901760
    %958 = vmatpush.msra.mxu0 %v957
    %v959 = vand.u32 %v801, 4294901760
    %v960 = vsub.f32 %v801, %v959
    %v961 = vand.u32 %v960, 4294901760
    %962 = vmatpush.msra.mxu0 %v961
    %v963 = vand.u32 %v800, 4294901760
    %v964 = vsub.f32 %v800, %v963
    %v965 = vand.u32 %v964, 4294901760
    %966 = vmatpush.msra.mxu0 %v965
    %v967 = vand.u32 %v810, 4294901760
    %968 = vmatmul.f32.gmra.mxu0 %v967
    %v969 = vpop.f32.mrf.mxu0
    %v970 = vadd.f32 %v937, %v969
    %971 = vdwg.mxu0
    %972 = vmatpush.msra.mxu0 0.0
    %973 = vmatpush.msra.mxu0 0.0
    %974 = vmatpush.msra.mxu0 0.0
    %975 = vmatpush.msra.mxu0 0.0
    %976 = vmatpush.msra.mxu0 0.0
    %977 = vmatpush.msra.mxu0 0.0
    %978 = vmatpush.msra.mxu0 0.0
    %979 = vmatpush.msra.mxu0 0.0
    %980 = vmatpush.msra.mxu0 0.0
    %981 = vmatpush.msra.mxu0 0.0
    %982 = vmatpush.msra.mxu0 0.0
    %983 = vmatpush.msra.mxu0 0.0
    %v984 = vand.u32 %v803, 4294901760
    %985 = vmatpush.msra.mxu0 %v984
    %v986 = vand.u32 %v802, 4294901760
    %987 = vmatpush.msra.mxu0 %v986
    %v988 = vand.u32 %v801, 4294901760
    %989 = vmatpush.msra.mxu0 %v988
    %v990 = vand.u32 %v800, 4294901760
    %991 = vmatpush.msra.mxu0 %v990
    %v992 = vand.u32 %v810, 4294901760
    %993 = vmatmul.f32.gmra.mxu0 %v992
    %v994 = vpop.f32.mrf.mxu0
    %v995 = vadd.f32 %v970, %v994
    %996 = vdwg.mxu0
    %v997 = vtanh.pop %v995
    %v998 = vld [vmem:[%s5] sm:$0xff]
    %v999 = vld [vmem:[%s5 + $0x8] sm:$0xff]
    %v1000 = vld [vmem:[%s5 + $0x10] sm:$0xff]
    %v1001 = vld [vmem:[%s5 + $0x18] sm:$0xff]
    %v1002 = vld [vmem:[%s6] sm:$0x1]
    %v1004 = vperm.slane %v1002, 0
    %v1007 = vsel %vm211, %v997, 0
    %1009 = vmatpush.msra.mxu0 0.0
    %1010 = vmatpush.msra.mxu0 0.0
    %1011 = vmatpush.msra.mxu0 0.0
    %1012 = vmatpush.msra.mxu0 0.0
    %1013 = vmatpush.msra.mxu0 0.0
    %1014 = vmatpush.msra.mxu0 0.0
    %1015 = vmatpush.msra.mxu0 0.0
    %1016 = vmatpush.msra.mxu0 0.0
    %1017 = vmatpush.msra.mxu0 0.0
    %1018 = vmatpush.msra.mxu0 0.0
    %1019 = vmatpush.msra.mxu0 0.0
    %1020 = vmatpush.msra.mxu0 0.0
    %v1021 = vand.u32 %v1001, 4294901760
    %1022 = vmatpush.msra.mxu0 %v1021
    %v1023 = vand.u32 %v1000, 4294901760
    %1024 = vmatpush.msra.mxu0 %v1023
    %v1025 = vand.u32 %v999, 4294901760
    %1026 = vmatpush.msra.mxu0 %v1025
    %v1027 = vand.u32 %v998, 4294901760
    %1028 = vmatpush.msra.mxu0 %v1027
    %v1029 = vand.u32 %v1007, 4294901760
    %v1030 = vsub.f32 %v1007, %v1029
    %v1031 = vand.u32 %v1030, 4294901760
    %v1032 = vsub.f32 %v1030, %v1031
    %v1033 = vand.u32 %v1032, 4294901760
    %1034 = vmatmul.f32.gmra.mxu0 %v1033
    %v1035 = vpop.f32.mrf.mxu0
    %v1036 = vadd.f32 %v1004, %v1035
    %1037 = vdwg.mxu0
    %1038 = vmatpush.msra.mxu0 0.0
    %1039 = vmatpush.msra.mxu0 0.0
    %1040 = vmatpush.msra.mxu0 0.0
    %1041 = vmatpush.msra.mxu0 0.0
    %1042 = vmatpush.msra.mxu0 0.0
    %1043 = vmatpush.msra.mxu0 0.0
    %1044 = vmatpush.msra.mxu0 0.0
    %1045 = vmatpush.msra.mxu0 0.0
    %1046 = vmatpush.msra.mxu0 0.0
    %1047 = vmatpush.msra.mxu0 0.0
    %1048 = vmatpush.msra.mxu0 0.0
    %1049 = vmatpush.msra.mxu0 0.0
    %v1050 = vand.u32 %v1001, 4294901760
    %v1051 = vsub.f32 %v1001, %v1050
    %v1052 = vand.u32 %v1051, 4294901760
    %v1053 = vsub.f32 %v1051, %v1052
    %v1054 = vand.u32 %v1053, 4294901760
    %1055 = vmatpush.msra.mxu0 %v1054
    %v1056 = vand.u32 %v1000, 4294901760
    %v1057 = vsub.f32 %v1000, %v1056
    %v1058 = vand.u32 %v1057, 4294901760
    %v1059 = vsub.f32 %v1057, %v1058
    %v1060 = vand.u32 %v1059, 4294901760
    %1061 = vmatpush.msra.mxu0 %v1060
    %v1062 = vand.u32 %v999, 4294901760
    %v1063 = vsub.f32 %v999, %v1062
    %v1064 = vand.u32 %v1063, 4294901760
    %v1065 = vsub.f32 %v1063, %v1064
    %v1066 = vand.u32 %v1065, 4294901760
    %1067 = vmatpush.msra.mxu0 %v1066
    %v1068 = vand.u32 %v998, 4294901760
    %v1069 = vsub.f32 %v998, %v1068
    %v1070 = vand.u32 %v1069, 4294901760
    %v1071 = vsub.f32 %v1069, %v1070
    %v1072 = vand.u32 %v1071, 4294901760
    %1073 = vmatpush.msra.mxu0 %v1072
    %v1074 = vand.u32 %v1007, 4294901760
    %1075 = vmatmul.f32.gmra.mxu0 %v1074
    %v1076 = vpop.f32.mrf.mxu0
    %v1077 = vadd.f32 %v1036, %v1076
    %1078 = vdwg.mxu0
    %1079 = vmatpush.msra.mxu0 0.0
    %1080 = vmatpush.msra.mxu0 0.0
    %1081 = vmatpush.msra.mxu0 0.0
    %1082 = vmatpush.msra.mxu0 0.0
    %1083 = vmatpush.msra.mxu0 0.0
    %1084 = vmatpush.msra.mxu0 0.0
    %1085 = vmatpush.msra.mxu0 0.0
    %1086 = vmatpush.msra.mxu0 0.0
    %1087 = vmatpush.msra.mxu0 0.0
    %1088 = vmatpush.msra.mxu0 0.0
    %1089 = vmatpush.msra.mxu0 0.0
    %1090 = vmatpush.msra.mxu0 0.0
    %v1091 = vand.u32 %v1001, 4294901760
    %v1092 = vsub.f32 %v1001, %v1091
    %1093 = vmatpush.msra.mxu0 %v1092
    %v1094 = vand.u32 %v1000, 4294901760
    %v1095 = vsub.f32 %v1000, %v1094
    %1096 = vmatpush.msra.mxu0 %v1095
    %v1097 = vand.u32 %v999, 4294901760
    %v1098 = vsub.f32 %v999, %v1097
    %1099 = vmatpush.msra.mxu0 %v1098
    %v1100 = vand.u32 %v998, 4294901760
    %v1101 = vsub.f32 %v998, %v1100
    %1102 = vmatpush.msra.mxu0 %v1101
    %v1103 = vand.u32 %v1007, 4294901760
    %v1104 = vsub.f32 %v1007, %v1103
    %1105 = vmatmul.f32.gmra.mxu0 %v1104
    %v1106 = vpop.f32.mrf.mxu0
    %v1107 = vadd.f32 %v1077, %v1106
    %1108 = vdwg.mxu0
    %1109 = vmatpush.msra.mxu0 0.0
    %1110 = vmatpush.msra.mxu0 0.0
    %1111 = vmatpush.msra.mxu0 0.0
    %1112 = vmatpush.msra.mxu0 0.0
    %1113 = vmatpush.msra.mxu0 0.0
    %1114 = vmatpush.msra.mxu0 0.0
    %1115 = vmatpush.msra.mxu0 0.0
    %1116 = vmatpush.msra.mxu0 0.0
    %1117 = vmatpush.msra.mxu0 0.0
    %1118 = vmatpush.msra.mxu0 0.0
    %1119 = vmatpush.msra.mxu0 0.0
    %1120 = vmatpush.msra.mxu0 0.0
    %v1121 = vand.u32 %v1001, 4294901760
    %1122 = vmatpush.msra.mxu0 %v1121
    %v1123 = vand.u32 %v1000, 4294901760
    %1124 = vmatpush.msra.mxu0 %v1123
    %v1125 = vand.u32 %v999, 4294901760
    %1126 = vmatpush.msra.mxu0 %v1125
    %v1127 = vand.u32 %v998, 4294901760
    %1128 = vmatpush.msra.mxu0 %v1127
    %v1129 = vand.u32 %v1007, 4294901760
    %v1130 = vsub.f32 %v1007, %v1129
    %v1131 = vand.u32 %v1130, 4294901760
    %1132 = vmatmul.f32.gmra.mxu0 %v1131
    %v1133 = vpop.f32.mrf.mxu0
    %v1134 = vadd.f32 %v1107, %v1133
    %1135 = vdwg.mxu0
    %1136 = vmatpush.msra.mxu0 0.0
    %1137 = vmatpush.msra.mxu0 0.0
    %1138 = vmatpush.msra.mxu0 0.0
    %1139 = vmatpush.msra.mxu0 0.0
    %1140 = vmatpush.msra.mxu0 0.0
    %1141 = vmatpush.msra.mxu0 0.0
    %1142 = vmatpush.msra.mxu0 0.0
    %1143 = vmatpush.msra.mxu0 0.0
    %1144 = vmatpush.msra.mxu0 0.0
    %1145 = vmatpush.msra.mxu0 0.0
    %1146 = vmatpush.msra.mxu0 0.0
    %1147 = vmatpush.msra.mxu0 0.0
    %v1148 = vand.u32 %v1001, 4294901760
    %v1149 = vsub.f32 %v1001, %v1148
    %v1150 = vand.u32 %v1149, 4294901760
    %1151 = vmatpush.msra.mxu0 %v1150
    %v1152 = vand.u32 %v1000, 4294901760
    %v1153 = vsub.f32 %v1000, %v1152
    %v1154 = vand.u32 %v1153, 4294901760
    %1155 = vmatpush.msra.mxu0 %v1154
    %v1156 = vand.u32 %v999, 4294901760
    %v1157 = vsub.f32 %v999, %v1156
    %v1158 = vand.u32 %v1157, 4294901760
    %1159 = vmatpush.msra.mxu0 %v1158
    %v1160 = vand.u32 %v998, 4294901760
    %v1161 = vsub.f32 %v998, %v1160
    %v1162 = vand.u32 %v1161, 4294901760
    %1163 = vmatpush.msra.mxu0 %v1162
    %v1164 = vand.u32 %v1007, 4294901760
    %1165 = vmatmul.f32.gmra.mxu0 %v1164
    %v1166 = vpop.f32.mrf.mxu0
    %v1167 = vadd.f32 %v1134, %v1166
    %1168 = vdwg.mxu0
    %1169 = vmatpush.msra.mxu0 0.0
    %1170 = vmatpush.msra.mxu0 0.0
    %1171 = vmatpush.msra.mxu0 0.0
    %1172 = vmatpush.msra.mxu0 0.0
    %1173 = vmatpush.msra.mxu0 0.0
    %1174 = vmatpush.msra.mxu0 0.0
    %1175 = vmatpush.msra.mxu0 0.0
    %1176 = vmatpush.msra.mxu0 0.0
    %1177 = vmatpush.msra.mxu0 0.0
    %1178 = vmatpush.msra.mxu0 0.0
    %1179 = vmatpush.msra.mxu0 0.0
    %1180 = vmatpush.msra.mxu0 0.0
    %v1181 = vand.u32 %v1001, 4294901760
    %1182 = vmatpush.msra.mxu0 %v1181
    %v1183 = vand.u32 %v1000, 4294901760
    %1184 = vmatpush.msra.mxu0 %v1183
    %v1185 = vand.u32 %v999, 4294901760
    %1186 = vmatpush.msra.mxu0 %v1185
    %v1187 = vand.u32 %v998, 4294901760
    %1188 = vmatpush.msra.mxu0 %v1187
    %v1189 = vand.u32 %v1007, 4294901760
    %1190 = vmatmul.f32.gmra.mxu0 %v1189
    %v1191 = vpop.f32.mrf.mxu0
    %v1192 = vadd.f32 %v1167, %v1191
    %1193 = vdwg.mxu0
    %vm1194 = vcmask 15360
    %1195 = vst.msk [vmem:[%s7] sm:$0xff] %vm1194, %v1192
    // Predicated region
    $region34: #{_forward_small.1} parent=1 // pred_check
      _
    $region35: #{_forward_small.1} parent=1 // pred_check_branch
      %1197 = sbr.rel (0) target = $region37
    $region36: #{_forward_small.1} parent=1 // pred_region
      _
    $region37: #{_forward_small.1} parent=1 // pred_fallthru
      _
    // Predicated region
    $region38: #{_forward_small.1} parent=1 // pred_check
      _
    $region39: #{_forward_small.1} parent=1 // pred_check_branch
      %1199 = sbr.rel (0) target = $region41
    $region40: #{_forward_small.1} parent=1 // pred_region
      _
    $region41: #{_forward_small.1} parent=1 // pred_fallthru
      _
    %1200 = vsyncpa [#allocation3], 1

</llo_original>
